<compile_context>
chip_gen: v7x
topology: tpu7x:2x2x1
jax: 0.10.0
libtpu: 0.0.40
codegen_flags: <defaults>
</compile_context>

<pallas_src>
import functools

import jax
import jax.numpy as jnp
from jax.experimental import pallas as pl
from jax.experimental.pallas import tpu as pltpu


# ----------------------------------------------------------------------------
# Fused kernel: conv1 + BN1 + Mish + conv2 + BN2 + residual (whole batch/step)
# ----------------------------------------------------------------------------
def _basic_block_kernel(x_ref, w1_ref, b1_ref, w2_ref, b2_ref, o_ref, xpad_ref,
                        *, N, H, WC, dilation):
    d = dilation
    pad = dilation                      # 'same' 3x3 conv: effective pad = dilation
    Hp = H + 2 * pad

    # Zero ONLY the 2*pad boundary rows of the shared padded scratch (single
    # grid step -> done once); interior rows are always overwritten below.
    xpad_ref[:, 0:pad, :] = jnp.zeros((N, pad, WC), jnp.float32)
    xpad_ref[:, pad + H:Hp, :] = jnp.zeros((N, pad, WC), jnp.float32)

    x = x_ref[...]                      # (N, H, W*C) bf16, fully lane-dense
    xf = x.astype(jnp.float32)
    xpad_ref[:, pad:pad + H, :] = xf

    def conv(w_ref):
        # Fold the 3 kh taps into K: lane-concat the three row-shifted views of
        # the padded scratch -> ONE (N*H, 3*WC) x (3*WC, WC) MXU matmul.
        taps = [xpad_ref[:, kh * d: kh * d + H, :] for kh in range(3)]
        slab = jnp.concatenate(taps, axis=-1).astype(jnp.bfloat16)   # (N,H,3*WC)
        out = jnp.dot(slab.reshape(N * H, 3 * WC), w_ref[...],
                      preferred_element_type=jnp.float32)
        return out.reshape(N, H, WC)

    # ---- conv1 (BN1 scale pre-folded into w1) + bias1 + Mish -----------------
    h1 = conv(w1_ref) + b1_ref[...]
    # Mish via single-exp identity; clamp: mish(h) ~= h for h > 20.
    sp = 1.0 + jnp.exp(jnp.minimum(h1, 20.0))
    sp2 = sp * sp
    h1 = h1 * (sp2 - 1.0) * pl.reciprocal(sp2 + 1.0, approx=True)

    # ---- conv2 input overwrites the interior rows of the SAME scratch --------
    xpad_ref[:, pad:pad + H, :] = h1

    # ---- conv2 (BN2 scale pre-folded into w2) + bias2 + residual -------------
    out = conv(w2_ref) + b2_ref[...] + xf
    o_ref[...] = out.astype(o_ref.dtype)


# ----------------------------------------------------------------------------
# Weight folding: 3x3 conv -> block-banded (3*W*Cin, W*Cout) matrix
# (kw taps + W zero-padding folded in; kh taps folded into the K dimension)
# ----------------------------------------------------------------------------
def _fold_conv_weight(w_hwio, W_out, dilation):
    """big[kh, w_src*Cin+ci, w_dst*Cout+co] =
         sum_kw [w_src == w_dst + kw*dilation - pad] * w[kh, kw, ci, co]
    Out-of-range source columns are simply absent => implements W zero-padding."""
    KH, KW, Cin, Cout = w_hwio.shape
    pad = dilation
    w_src = jnp.arange(W_out)
    w_dst = jnp.arange(W_out)
    kw = jnp.arange(KW)
    sel = (w_src[None, :, None] ==
           (w_dst[None, None, :] + kw[:, None, None] * dilation - pad))
    sel = sel.astype(w_hwio.dtype)                      # (KW, W, W)
    big = jnp.einsum('kpq,hkio->hpiqo', sel, w_hwio)    # (KH, W, Cin, W, Cout)
    return big.reshape(KH * W_out * Cin, W_out * Cout)  # kh folded into K rows


# ----------------------------------------------------------------------------
# BasicBlock forward (NCHW in / NCHW out, like PyTorch)
# ----------------------------------------------------------------------------
def basic_block_forward(params, x_nchw, *, dilation=1):
    N, C, H, W = x_nchw.shape
    Cout = params["w1"].shape[-1]
    assert Cout == C, "residual add (downsample=None) requires planes == inplanes"
    WC = W * C                          # = 128 for the demo config (16*8)
    Hp = H + 2 * dilation

    # NCHW -> (N, H, W*C): channels-last with W folded into the lane axis.
    x_folded = (jnp.transpose(x_nchw, (0, 2, 3, 1))
                .reshape(N, H, WC).astype(jnp.bfloat16))

    # Fold BN scale into the conv weights (trace time), then block-band + kh-fold.
    w1_eff = params["w1"] * params["scale1"][None, None, None, :]
    w2_eff = params["w2"] * params["scale2"][None, None, None, :]
    w1 = _fold_conv_weight(w1_eff, W, dilation).astype(jnp.bfloat16)  # (3*WC, WC)
    w2 = _fold_conv_weight(w2_eff, W, dilation).astype(jnp.bfloat16)  # (3*WC, WC)
    b1 = jnp.tile(params["bias1"], W).reshape(1, WC).astype(jnp.float32)
    b2 = jnp.tile(params["bias2"], W).reshape(1, WC).astype(jnp.float32)

    kern = functools.partial(_basic_block_kernel, N=N, H=H, WC=WC,
                             dilation=dilation)
    out = pl.pallas_call(
        kern,
        out_shape=jax.ShapeDtypeStruct((N, H, WC), jnp.bfloat16),
        grid=(1,),                                       # whole batch in one step
        in_specs=[
            pl.BlockSpec((N, H, WC), lambda i: (0, 0, 0)),      # x (residual)
            pl.BlockSpec((3 * WC, WC), lambda i: (0, 0)),       # folded w1*scale1
            pl.BlockSpec((1, WC), lambda i: (0, 0)),            # bias1
            pl.BlockSpec((3 * WC, WC), lambda i: (0, 0)),       # folded w2*scale2
            pl.BlockSpec((1, WC), lambda i: (0, 0)),            # bias2
        ],
        out_specs=pl.BlockSpec((N, H, WC), lambda i: (0, 0, 0)),
        scratch_shapes=[pltpu.VMEM((N, Hp, WC), jnp.float32)],   # shared pad buffer
        compiler_params=pltpu.CompilerParams(
            dimension_semantics=("arbitrary",)),
    )(x_folded, w1, b1, w2, b2)

    out = out.astype(jnp.float32)
    return jnp.transpose(out.reshape(N, H, W, C), (0, 3, 1, 2))


# ----------------------------------------------------------------------------
# Parameter construction (deterministic, synthetic) + BN folding (eval mode)
# ----------------------------------------------------------------------------
def _fold_bn(gamma, beta, mean, var, eps=1e-5):
    scale = gamma / jnp.sqrt(var + eps)
    bias = beta - mean * scale
    return scale.astype(jnp.float32), bias.astype(jnp.float32)


def make_basic_block_params(key, inplanes, planes):
    ks = jax.random.split(key, 6)
    w1 = jax.random.normal(ks[0], (3, 3, inplanes, planes), jnp.float32) * 0.1
    w2 = jax.random.normal(ks[1], (3, 3, planes, planes), jnp.float32) * 0.1
    g1 = 1.0 + 0.1 * jax.random.normal(ks[2], (planes,), jnp.float32)
    b1 = 0.1 * jax.random.normal(ks[3], (planes,), jnp.float32)
    m1 = jnp.zeros((planes,), jnp.float32)
    v1 = jnp.ones((planes,), jnp.float32)
    g2 = 1.0 + 0.1 * jax.random.normal(ks[4], (planes,), jnp.float32)
    b2 = 0.1 * jax.random.normal(ks[5], (planes,), jnp.float32)
    m2 = jnp.zeros((planes,), jnp.float32)
    v2 = jnp.ones((planes,), jnp.float32)
    s1, o1 = _fold_bn(g1, b1, m1, v1)
    s2, o2 = _fold_bn(g2, b2, m2, v2)
    return {"w1": w1, "scale1": s1, "bias1": o1,
            "w2": w2, "scale2": s2, "bias2": o2}


# ----------------------------------------------------------------------------
# Plain-JAX reference (mirrors the kernel's bf16 quantization points)
# ----------------------------------------------------------------------------
def _reference_forward(params, x_nchw, *, dilation=1):
    pad = dilation
    x = jnp.transpose(x_nchw, (0, 2, 3, 1)).astype(jnp.float32)
    xq = x.astype(jnp.bfloat16).astype(jnp.float32)
    # BN scale folded into weights before bf16 quantization, same as the kernel.
    w1 = (params["w1"] * params["scale1"]).astype(jnp.bfloat16).astype(jnp.float32)
    w2 = (params["w2"] * params["scale2"]).astype(jnp.bfloat16).astype(jnp.float32)

    def conv(inp, w):
        return jax.lax.conv_general_dilated(
            inp, w, window_strides=(1, 1),
            padding=[(pad, pad), (pad, pad)],
            rhs_dilation=(dilation, dilation),
            dimension_numbers=("NHWC", "HWIO", "NHWC"))

    h = conv(xq, w1) + params["bias1"]
    h = h * jnp.tanh(jnp.logaddexp(h, 0.0))              # exact Mish (f32)
    h = h.astype(jnp.bfloat16).astype(jnp.float32)
    o = conv(h, w2) + params["bias2"] + xq
    o = o.astype(jnp.bfloat16).astype(jnp.float32)       # mirror bf16 output store
    return jnp.transpose(o, (0, 3, 1, 2))


if __name__ == "__main__":
    key = jax.random.PRNGKey(0)
    kx, kp = jax.random.split(key)

    # inplanes = planes = 8, H = W = 16  ->  W*C = 128 (exactly one lane tile)
    N, C, H, W = 2, 8, 16, 16
    x = jax.random.normal(kx, (N, C, H, W), jnp.float32)
    params = make_basic_block_params(kp, inplanes=C, planes=C)

    out = basic_block_forward(params, x, dilation=1)
    out = jax.block_until_ready(out)

    ref = _reference_forward(params, x, dilation=1)
    assert out.shape == (N, C, H, W)
    err = float(jnp.max(jnp.abs(out - ref) / (1.0 + jnp.abs(ref))))
    assert err < 3e-2, f"mismatch vs reference: max normalized err = {err}"

    print("KERNEL_OK")
</pallas_src>

<mosaic_0001>
module attributes {stable_mosaic.version = 11 : i64} {
  func.func @_basic_block_kernel(%arg0: i32, %arg1: memref<2x16x128xbf16, #tpu.memory_space<vmem>>, %arg2: memref<384x128xbf16, #tpu.memory_space<vmem>>, %arg3: memref<1x128xf32, #tpu.memory_space<vmem>>, %arg4: memref<384x128xbf16, #tpu.memory_space<vmem>>, %arg5: memref<1x128xf32, #tpu.memory_space<vmem>>, %arg6: memref<2x16x128xbf16, #tpu.memory_space<vmem>>, %arg7: memref<2x18x128xf32, #tpu.memory_space<vmem>>) attributes {dimension_semantics = [#tpu.dimension_semantics<arbitrary>], iteration_bounds = array<i64: 1>, scalar_prefetch = 0 : i64, scratch_operands = 1 : i64, tpu.core_type = #tpu.core_type<tc>, window_params = [{pipeline_mode = #tpu.pipeline_mode<synchronous>, transform_indices = @transform_0, window_bounds = array<i64: 2, 16, 128>}, {pipeline_mode = #tpu.pipeline_mode<synchronous>, transform_indices = @transform_1, window_bounds = array<i64: 384, 128>}, {pipeline_mode = #tpu.pipeline_mode<synchronous>, transform_indices = @transform_2, window_bounds = array<i64: 1, 128>}, {pipeline_mode = #tpu.pipeline_mode<synchronous>, transform_indices = @transform_3, window_bounds = array<i64: 384, 128>}, {pipeline_mode = #tpu.pipeline_mode<synchronous>, transform_indices = @transform_4, window_bounds = array<i64: 1, 128>}, {pipeline_mode = #tpu.pipeline_mode<synchronous>, transform_indices = @transform_5, window_bounds = array<i64: 2, 16, 128>}]} {
    %cst = arith.constant 0.000000e+00 : f32
    %0 = vector.broadcast %cst : f32 to vector<2x1x128xf32>
    %c0 = arith.constant 0 : index
    %c0_0 = arith.constant 0 : index
    %c0_1 = arith.constant 0 : index
    %1 = vector.load %arg7[%c0, %c0_0, %c0_1] : memref<2x18x128xf32, #tpu.memory_space<vmem>>, vector<2x1x128xf32>
    tpu.vector_store %arg7[%c0, %c0_0, %c0_1], %0 {strides = array<i32>} : memref<2x18x128xf32, #tpu.memory_space<vmem>>, vector<2x1x128xf32>,
    %cst_2 = arith.constant 0.000000e+00 : f32
    %2 = vector.broadcast %cst_2 : f32 to vector<2x1x128xf32>
    %c0_3 = arith.constant 0 : index
    %c17 = arith.constant 17 : index
    %c0_4 = arith.constant 0 : index
    %3 = vector.load %arg7[%c0_3, %c17, %c0_4] : memref<2x18x128xf32, #tpu.memory_space<vmem>>, vector<2x1x128xf32>
    tpu.vector_store %arg7[%c0_3, %c17, %c0_4], %2 {strides = array<i32>} : memref<2x18x128xf32, #tpu.memory_space<vmem>>, vector<2x1x128xf32>,
    %c0_5 = arith.constant 0 : index
    %c0_6 = arith.constant 0 : index
    %c0_7 = arith.constant 0 : index
    %4 = vector.load %arg1[%c0_5, %c0_6, %c0_7] : memref<2x16x128xbf16, #tpu.memory_space<vmem>>, vector<2x16x128xbf16>
    %5 = arith.extf %4 : vector<2x16x128xbf16> to vector<2x16x128xf32>
    %c0_8 = arith.constant 0 : index
    %c1 = arith.constant 1 : index
    %c0_9 = arith.constant 0 : index
    %6 = vector.load %arg7[%c0_8, %c1, %c0_9] : memref<2x18x128xf32, #tpu.memory_space<vmem>>, vector<2x16x128xf32>
    tpu.vector_store %arg7[%c0_8, %c1, %c0_9], %5 {strides = array<i32>} : memref<2x18x128xf32, #tpu.memory_space<vmem>>, vector<2x16x128xf32>,
    %c0_10 = arith.constant 0 : index
    %c0_11 = arith.constant 0 : index
    %c0_12 = arith.constant 0 : index
    %7 = vector.load %arg7[%c0_10, %c0_11, %c0_12] : memref<2x18x128xf32, #tpu.memory_space<vmem>>, vector<2x16x128xf32>
    %c0_13 = arith.constant 0 : index
    %c1_14 = arith.constant 1 : index
    %c0_15 = arith.constant 0 : index
    %8 = vector.load %arg7[%c0_13, %c1_14, %c0_15] : memref<2x18x128xf32, #tpu.memory_space<vmem>>, vector<2x16x128xf32>
    %c0_16 = arith.constant 0 : index
    %c2 = arith.constant 2 : index
    %c0_17 = arith.constant 0 : index
    %9 = vector.load %arg7[%c0_16, %c2, %c0_17] : memref<2x18x128xf32, #tpu.memory_space<vmem>>, vector<2x16x128xf32>
    %10 = tpu.concatenate %7, %8, %9 in 2 : vector<2x16x128xf32>, vector<2x16x128xf32>, vector<2x16x128xf32> -> vector<2x16x384xf32>
    %11 = arith.truncf %10 : vector<2x16x384xf32> to vector<2x16x384xbf16>
    %12 = vector.shape_cast %11 : vector<2x16x384xbf16> to vector<32x384xbf16>
    %c0_18 = arith.constant 0 : index
    %c0_19 = arith.constant 0 : index
    %13 = vector.load %arg2[%c0_18, %c0_19] : memref<384x128xbf16, #tpu.memory_space<vmem>>, vector<384x128xbf16>
    %cst_20 = arith.constant dense<0.000000e+00> : vector<32x128xf32>
    %14 = tpu.matmul %12, %13, %cst_20 {dimension_numbers = #tpu.dot_dimension_numbers<[1], [0], [0], [1], [0, 0, 1, 1], [], []>} : vector<32x384xbf16>, vector<384x128xbf16>, vector<32x128xf32> -> vector<32x128xf32>
    %15 = vector.shape_cast %14 : vector<32x128xf32> to vector<2x16x128xf32>
    %c0_21 = arith.constant 0 : index
    %c0_22 = arith.constant 0 : index
    %16 = vector.load %arg3[%c0_21, %c0_22] : memref<1x128xf32, #tpu.memory_space<vmem>>, vector<1x128xf32>
    %17 = vector.shape_cast %16 : vector<1x128xf32> to vector<1x1x128xf32>
    %18 = vector.broadcast %17 : vector<1x1x128xf32> to vector<2x16x128xf32>
    %19 = arith.addf %15, %18 : vector<2x16x128xf32>
    %cst_23 = arith.constant 2.000000e+01 : f32
    %20 = vector.broadcast %cst_23 : f32 to vector<2x16x128xf32>
    %21 = arith.minimumf %19, %20 : vector<2x16x128xf32>
    %22 = math.exp %21 : vector<2x16x128xf32>
    %cst_24 = arith.constant 1.000000e+00 : f32
    %23 = vector.broadcast %cst_24 : f32 to vector<2x16x128xf32>
    %24 = arith.addf %23, %22 : vector<2x16x128xf32>
    %25 = arith.mulf %24, %24 : vector<2x16x128xf32>
    %cst_25 = arith.constant 1.000000e+00 : f32
    %26 = vector.broadcast %cst_25 : f32 to vector<2x16x128xf32>
    %27 = arith.subf %25, %26 : vector<2x16x128xf32>
    %28 = arith.mulf %19, %27 : vector<2x16x128xf32>
    %cst_26 = arith.constant 1.000000e+00 : f32
    %29 = vector.broadcast %cst_26 : f32 to vector<2x16x128xf32>
    %30 = arith.addf %25, %29 : vector<2x16x128xf32>
    %31 = tpu.reciprocal %30 {approx = true} : vector<2x16x128xf32> -> vector<2x16x128xf32>
    %32 = arith.mulf %28, %31 : vector<2x16x128xf32>
    %c0_27 = arith.constant 0 : index
    %c1_28 = arith.constant 1 : index
    %c0_29 = arith.constant 0 : index
    %33 = vector.load %arg7[%c0_27, %c1_28, %c0_29] : memref<2x18x128xf32, #tpu.memory_space<vmem>>, vector<2x16x128xf32>
    tpu.vector_store %arg7[%c0_27, %c1_28, %c0_29], %32 {strides = array<i32>} : memref<2x18x128xf32, #tpu.memory_space<vmem>>, vector<2x16x128xf32>,
    %c0_30 = arith.constant 0 : index
    %c0_31 = arith.constant 0 : index
    %c0_32 = arith.constant 0 : index
    %34 = vector.load %arg7[%c0_30, %c0_31, %c0_32] : memref<2x18x128xf32, #tpu.memory_space<vmem>>, vector<2x16x128xf32>
    %c0_33 = arith.constant 0 : index
    %c1_34 = arith.constant 1 : index
    %c0_35 = arith.constant 0 : index
    %35 = vector.load %arg7[%c0_33, %c1_34, %c0_35] : memref<2x18x128xf32, #tpu.memory_space<vmem>>, vector<2x16x128xf32>
    %c0_36 = arith.constant 0 : index
    %c2_37 = arith.constant 2 : index
    %c0_38 = arith.constant 0 : index
    %36 = vector.load %arg7[%c0_36, %c2_37, %c0_38] : memref<2x18x128xf32, #tpu.memory_space<vmem>>, vector<2x16x128xf32>
    %37 = tpu.concatenate %34, %35, %36 in 2 : vector<2x16x128xf32>, vector<2x16x128xf32>, vector<2x16x128xf32> -> vector<2x16x384xf32>
    %38 = arith.truncf %37 : vector<2x16x384xf32> to vector<2x16x384xbf16>
    %39 = vector.shape_cast %38 : vector<2x16x384xbf16> to vector<32x384xbf16>
    %c0_39 = arith.constant 0 : index
    %c0_40 = arith.constant 0 : index
    %40 = vector.load %arg4[%c0_39, %c0_40] : memref<384x128xbf16, #tpu.memory_space<vmem>>, vector<384x128xbf16>
    %cst_41 = arith.constant dense<0.000000e+00> : vector<32x128xf32>
    %41 = tpu.matmul %39, %40, %cst_41 {dimension_numbers = #tpu.dot_dimension_numbers<[1], [0], [0], [1], [0, 0, 1, 1], [], []>} : vector<32x384xbf16>, vector<384x128xbf16>, vector<32x128xf32> -> vector<32x128xf32>
    %42 = vector.shape_cast %41 : vector<32x128xf32> to vector<2x16x128xf32>
    %c0_42 = arith.constant 0 : index
    %c0_43 = arith.constant 0 : index
    %43 = vector.load %arg5[%c0_42, %c0_43] : memref<1x128xf32, #tpu.memory_space<vmem>>, vector<1x128xf32>
    %44 = vector.shape_cast %43 : vector<1x128xf32> to vector<1x1x128xf32>
    %45 = vector.broadcast %44 : vector<1x1x128xf32> to vector<2x16x128xf32>
    %46 = arith.addf %42, %45 : vector<2x16x128xf32>
    %47 = arith.addf %46, %5 : vector<2x16x128xf32>
    %48 = arith.truncf %47 : vector<2x16x128xf32> to vector<2x16x128xbf16>
    %c0_44 = arith.constant 0 : index
    %c0_45 = arith.constant 0 : index
    %c0_46 = arith.constant 0 : index
    %49 = vector.load %arg6[%c0_44, %c0_45, %c0_46] : memref<2x16x128xbf16, #tpu.memory_space<vmem>>, vector<2x16x128xbf16>
    tpu.vector_store %arg6[%c0_44, %c0_45, %c0_46], %48 {strides = array<i32>} : memref<2x16x128xbf16, #tpu.memory_space<vmem>>, vector<2x16x128xbf16>,
    return
  }
  func.func @transform_0(%arg0: i32) -> (i32, i32, i32) {
    %c0_i32 = arith.constant 0 : i32
    %c0_i32_0 = arith.constant 0 : i32
    %c0_i32_1 = arith.constant 0 : i32
    %c0_i32_2 = arith.constant 0 : i32
    return %c0_i32, %c0_i32_0, %c0_i32_1 : i32, i32, i32
  }
  func.func @transform_1(%arg0: i32) -> (i32, i32) {
    %c0_i32 = arith.constant 0 : i32
    %c0_i32_0 = arith.constant 0 : i32
    %c0_i32_1 = arith.constant 0 : i32
    return %c0_i32, %c0_i32_0 : i32, i32
  }
  func.func @transform_2(%arg0: i32) -> (i32, i32) {
    %c0_i32 = arith.constant 0 : i32
    %c0_i32_0 = arith.constant 0 : i32
    %c0_i32_1 = arith.constant 0 : i32
    return %c0_i32, %c0_i32_0 : i32, i32
  }
  func.func @transform_3(%arg0: i32) -> (i32, i32) {
    %c0_i32 = arith.constant 0 : i32
    %c0_i32_0 = arith.constant 0 : i32
    %c0_i32_1 = arith.constant 0 : i32
    return %c0_i32, %c0_i32_0 : i32, i32
  }
  func.func @transform_4(%arg0: i32) -> (i32, i32) {
    %c0_i32 = arith.constant 0 : i32
    %c0_i32_0 = arith.constant 0 : i32
    %c0_i32_1 = arith.constant 0 : i32
    return %c0_i32, %c0_i32_0 : i32, i32
  }
  func.func @transform_5(%arg0: i32) -> (i32, i32, i32) {
    %c0_i32 = arith.constant 0 : i32
    %c0_i32_0 = arith.constant 0 : i32
    %c0_i32_1 = arith.constant 0 : i32
    %c0_i32_2 = arith.constant 0 : i32
    return %c0_i32, %c0_i32_0, %c0_i32_1 : i32, i32, i32
  }
}

</mosaic_0001>

<llo_original>
// kernel: tpu_custom_call.1
$region0: #{tpu_custom_call.1}
  #allocation0 [shape = 'u32[]', space=smem, size = 0x4, offset = 0x4, fixed_abs, tag = 'smem constant byte address 0x4 - core index']
  #allocation1 [shape = 'u32[144,128]{1,0:T(1,128)}', space=vmem, size = 0x12000, scoped, tag = 'internal scratch']
  #allocation2 [shape = 'f32[2,18,128]{2,1,0:T(8,128)}', space=vmem, size = 0x6000, scoped, tag = 'scratch operand']
  %s0 = inlined_call_operand.hbm [shape: bf16[2,16,128], index: 0, kind: input, shape index: {}]
  %s1 = inlined_call_operand.hbm [shape: bf16[384,128], index: 1, kind: input, shape index: {}]
  %s2 = inlined_call_operand.vmem [shape: f32[1,128], index: 2, kind: input, shape index: {}]
  %s3 = inlined_call_operand.hbm [shape: bf16[384,128], index: 3, kind: input, shape index: {}]
  %s4 = inlined_call_operand.vmem [shape: f32[1,128], index: 4, kind: input, shape index: {}]
  %s5 = inlined_call_operand.hbm [shape: bf16[2,16,128], index: 5, kind: output, shape index: {}]
  %s6 = sld [smem:[#allocation0]]
  $region42: #{tpu_custom_call.1} parent=0
    _
  %s8 = ssub.s32 1, %s6
  %s9 = scalar_select 0, %s8, %s6
  $region1: #{tpu_custom_call.1} parent=0
    #allocation3 [shape = 'u8[8192]{0}', space=vmem, size = 0x2000, scoped, tag = 'input window, operand 0, single buffered']
    #allocation4 [shape = 's32[1]{0}', space=sflag, size = 0x4, scoped, tag = 'scoped memory for tpu_custom_call.1']
    #allocation5 [shape = 's32[1]{0}', space=sflag, size = 0x4, scoped, tag = 'scoped memory for tpu_custom_call.1']
    #allocation6 [shape = 'u8[98304]{0}', space=vmem, size = 0x18000, scoped, tag = 'input window, operand 1, single buffered']
    #allocation7 [shape = 's32[1]{0}', space=sflag, size = 0x4, scoped, tag = 'scoped memory for tpu_custom_call.1']
    #allocation8 [shape = 'u8[98304]{0}', space=vmem, size = 0x18000, scoped, tag = 'input window, operand 3, single buffered']
    #allocation9 [shape = 'u8[8192]{0}', space=vmem, size = 0x2000, scoped, tag = 'output window, operand 0, single buffered']
    %10 = vsyncpa [#allocation4], 0
    %11 = vsyncpa [#allocation7], 0
    %12 = vsyncpa [#allocation5], 0
    // Predicated region
    $region2: #{tpu_custom_call.1} parent=1 // pred_check
      _
    $region3: #{tpu_custom_call.1} parent=1 // pred_check_branch
      %14 = sbr.rel (0) target = $region5
    $region4: #{tpu_custom_call.1} parent=1 // pred_region
      %s16 = ssub.s32 256, 256
      %17 = vsyncadd [#allocation4], %s16
      %s18 = sshll.u32 [#allocation3], 4
      %s19 = int_to_ptr.vmem [resolvable:$true] %s18
      %24 = dma.hbm_to_vmem [thread:$0]  %s0, 256, %s19, [#allocation4], 64, 64, 4
    $region5: #{tpu_custom_call.1} parent=1 // pred_fallthru
      _
    // Predicated region
    $region6: #{tpu_custom_call.1} parent=1 // pred_check
      _
    $region7: #{tpu_custom_call.1} parent=1 // pred_check_branch
      %26 = sbr.rel (0) target = $region9
    $region8: #{tpu_custom_call.1} parent=1 // pred_region
      %s28 = ssub.s32 3072, 3072
      %29 = vsyncadd [#allocation7], %s28
      %s30 = sshll.u32 [#allocation6], 4
      %s31 = int_to_ptr.vmem [resolvable:$true] %s30
      %36 = dma.hbm_to_vmem [thread:$0]  %s1, 3072, %s31, [#allocation7], 64, 64, 4
    $region9: #{tpu_custom_call.1} parent=1 // pred_fallthru
      _
    // Predicated region
    $region10: #{tpu_custom_call.1} parent=1 // pred_check
      _
    $region11: #{tpu_custom_call.1} parent=1 // pred_check_branch
      %38 = sbr.rel (0) target = $region13
    $region12: #{tpu_custom_call.1} parent=1 // pred_region
      _
    $region13: #{tpu_custom_call.1} parent=1 // pred_fallthru
      _
    // Predicated region
    $region14: #{tpu_custom_call.1} parent=1 // pred_check
      _
    $region15: #{tpu_custom_call.1} parent=1 // pred_check_branch
      %40 = sbr.rel (0) target = $region17
    $region16: #{tpu_custom_call.1} parent=1 // pred_region
      %s42 = ssub.s32 3072, 3072
      %43 = vsyncadd [#allocation7], %s42
      %s44 = sshll.u32 [#allocation8], 4
      %s45 = int_to_ptr.vmem [resolvable:$true] %s44
      %50 = dma.hbm_to_vmem [thread:$0]  %s3, 3072, %s45, [#allocation7], 64, 64, 4
    $region17: #{tpu_custom_call.1} parent=1 // pred_fallthru
      _
    // Predicated region
    $region18: #{tpu_custom_call.1} parent=1 // pred_check
      _
    $region19: #{tpu_custom_call.1} parent=1 // pred_check_branch
      %52 = sbr.rel (0) target = $region21
    $region20: #{tpu_custom_call.1} parent=1 // pred_region
      _
    $region21: #{tpu_custom_call.1} parent=1 // pred_fallthru
      _
    // Predicated region
    $region22: #{tpu_custom_call.1} parent=1 // pred_check
      _
    $region23: #{tpu_custom_call.1} parent=1 // pred_check_branch
      %54 = sbr.rel (0) target = $region25
    $region24: #{tpu_custom_call.1} parent=1 // pred_region
      %55 = dma.done [#allocation4], 256
    $region25: #{tpu_custom_call.1} parent=1 // pred_fallthru
      _
    // Predicated region
    $region26: #{tpu_custom_call.1} parent=1 // pred_check
      _
    $region27: #{tpu_custom_call.1} parent=1 // pred_check_branch
      %57 = sbr.rel (0) target = $region29
    $region28: #{tpu_custom_call.1} parent=1 // pred_region
      %58 = dma.done [#allocation7], 3072
    $region29: #{tpu_custom_call.1} parent=1 // pred_fallthru
      _
    // Predicated region
    $region30: #{tpu_custom_call.1} parent=1 // pred_check
      _
    $region31: #{tpu_custom_call.1} parent=1 // pred_check_branch
      %60 = sbr.rel (0) target = $region33
    $region32: #{tpu_custom_call.1} parent=1 // pred_region
      %61 = dma.done [#allocation7], 3072
    $region33: #{tpu_custom_call.1} parent=1 // pred_fallthru
      _
    %63 = vst [vmem:[#allocation2] sm:$0x1] 0.0
    %64 = vst [vmem:[#allocation2 + $0x18] sm:$0x1] 0.0
    %65 = vst [vmem:[#allocation2 + $0x11] sm:$0x1] 0.0
    %66 = vst [vmem:[#allocation2 + $0x29] sm:$0x1] 0.0
    %v67 = vld [vmem:[#allocation3] sm:$0xf]
    %v68 = vld [vmem:[#allocation3 + $0x4] sm:$0xf]
    %v69 = vld [vmem:[#allocation3 + $0x8] sm:$0xf]
    %v70 = vld [vmem:[#allocation3 + $0xc] sm:$0xf]
    %v71 = vunpack.c.l.bf16 %v67
    %v72 = vunpack.c.l.bf16 %v68
    %v73 = vunpack.c.l.bf16 %v69
    %v74 = vunpack.c.l.bf16 %v70
    %75 = vst [vmem:[#allocation2 + $0x1] sm:$0xff] %v71
    %76 = vst [vmem:[#allocation2 + $0x9] sm:$0xff] %v72
    %77 = vst [vmem:[#allocation2 + $0x19] sm:$0xff] %v73
    %78 = vst [vmem:[#allocation2 + $0x21] sm:$0xff] %v74
    %v79 = vld [vmem:[#allocation2] sm:$0xff]
    %v80 = vld [vmem:[#allocation2 + $0x8] sm:$0xff]
    %v81 = vld [vmem:[#allocation2 + $0x18] sm:$0xff]
    %v82 = vld [vmem:[#allocation2 + $0x20] sm:$0xff]
    %v83 = vld [vmem:[#allocation2 + $0x1] sm:$0xff]
    %v84 = vld [vmem:[#allocation2 + $0x9] sm:$0xff]
    %v85 = vld [vmem:[#allocation2 + $0x19] sm:$0xff]
    %v86 = vld [vmem:[#allocation2 + $0x21] sm:$0xff]
    %v87 = vld [vmem:[#allocation2 + $0x2] sm:$0xff]
    %v88 = vld [vmem:[#allocation2 + $0xa] sm:$0xff]
    %v89 = vld [vmem:[#allocation2 + $0x1a] sm:$0xff]
    %v90 = vld [vmem:[#allocation2 + $0x22] sm:$0xff]
    %v91 = vpack.c.bf16 %v80, %v79
    %v92 = vpack.c.bf16 %v84, %v83
    %v93 = vpack.c.bf16 %v88, %v87
    %v94 = vpack.c.bf16 %v82, %v81
    %v95 = vpack.c.bf16 %v86, %v85
    %v96 = vpack.c.bf16 %v90, %v89
    %v97 = vld [vmem:[#allocation6] sm:$0xf]
    %v98 = vld [vmem:[#allocation6 + $0x4] sm:$0xf]
    %v99 = vld [vmem:[#allocation6 + $0x8] sm:$0xf]
    %v100 = vld [vmem:[#allocation6 + $0xc] sm:$0xf]
    %v101 = vld [vmem:[#allocation6 + $0x10] sm:$0xf]
    %v102 = vld [vmem:[#allocation6 + $0x14] sm:$0xf]
    %v103 = vld [vmem:[#allocation6 + $0x18] sm:$0xf]
    %v104 = vld [vmem:[#allocation6 + $0x1c] sm:$0xf]
    %v105 = vld [vmem:[#allocation6 + $0x20] sm:$0xf]
    %v106 = vld [vmem:[#allocation6 + $0x24] sm:$0xf]
    %v107 = vld [vmem:[#allocation6 + $0x28] sm:$0xf]
    %v108 = vld [vmem:[#allocation6 + $0x2c] sm:$0xf]
    %v109 = vld [vmem:[#allocation6 + $0x30] sm:$0xf]
    %v110 = vld [vmem:[#allocation6 + $0x34] sm:$0xf]
    %v111 = vld [vmem:[#allocation6 + $0x38] sm:$0xf]
    %v112 = vld [vmem:[#allocation6 + $0x3c] sm:$0xf]
    %v113 = vld [vmem:[#allocation6 + $0x40] sm:$0xf]
    %v114 = vld [vmem:[#allocation6 + $0x44] sm:$0xf]
    %v115 = vld [vmem:[#allocation6 + $0x48] sm:$0xf]
    %v116 = vld [vmem:[#allocation6 + $0x4c] sm:$0xf]
    %v117 = vld [vmem:[#allocation6 + $0x50] sm:$0xf]
    %v118 = vld [vmem:[#allocation6 + $0x54] sm:$0xf]
    %v119 = vld [vmem:[#allocation6 + $0x58] sm:$0xf]
    %v120 = vld [vmem:[#allocation6 + $0x5c] sm:$0xf]
    %v121 = vld [vmem:[#allocation6 + $0x60] sm:$0xf]
    %v122 = vld [vmem:[#allocation6 + $0x64] sm:$0xf]
    %v123 = vld [vmem:[#allocation6 + $0x68] sm:$0xf]
    %v124 = vld [vmem:[#allocation6 + $0x6c] sm:$0xf]
    %v125 = vld [vmem:[#allocation6 + $0x70] sm:$0xf]
    %v126 = vld [vmem:[#allocation6 + $0x74] sm:$0xf]
    %v127 = vld [vmem:[#allocation6 + $0x78] sm:$0xf]
    %v128 = vld [vmem:[#allocation6 + $0x7c] sm:$0xf]
    %v129 = vld [vmem:[#allocation6 + $0x80] sm:$0xf]
    %v130 = vld [vmem:[#allocation6 + $0x84] sm:$0xf]
    %v131 = vld [vmem:[#allocation6 + $0x88] sm:$0xf]
    %v132 = vld [vmem:[#allocation6 + $0x8c] sm:$0xf]
    %v133 = vld [vmem:[#allocation6 + $0x90] sm:$0xf]
    %v134 = vld [vmem:[#allocation6 + $0x94] sm:$0xf]
    %v135 = vld [vmem:[#allocation6 + $0x98] sm:$0xf]
    %v136 = vld [vmem:[#allocation6 + $0x9c] sm:$0xf]
    %v137 = vld [vmem:[#allocation6 + $0xa0] sm:$0xf]
    %v138 = vld [vmem:[#allocation6 + $0xa4] sm:$0xf]
    %v139 = vld [vmem:[#allocation6 + $0xa8] sm:$0xf]
    %v140 = vld [vmem:[#allocation6 + $0xac] sm:$0xf]
    %v141 = vld [vmem:[#allocation6 + $0xb0] sm:$0xf]
    %v142 = vld [vmem:[#allocation6 + $0xb4] sm:$0xf]
    %v143 = vld [vmem:[#allocation6 + $0xb8] sm:$0xf]
    %v144 = vld [vmem:[#allocation6 + $0xbc] sm:$0xf]
    %v193 = vunpack.c.l.b16 %v97
    %v194 = vunpack.c.l.b16 %v98
    %v195 = vunpack.c.l.b16 %v99
    %v196 = vunpack.c.l.b16 %v100
    %v197 = vunpack.c.l.b16 %v101
    %v198 = vunpack.c.l.b16 %v102
    %v199 = vunpack.c.l.b16 %v103
    %v200 = vunpack.c.l.b16 %v104
    %v201 = vunpack.c.l.b16 %v105
    %v202 = vunpack.c.l.b16 %v106
    %v203 = vunpack.c.l.b16 %v107
    %v204 = vunpack.c.l.b16 %v108
    %v205 = vunpack.c.l.b16 %v109
    %v206 = vunpack.c.l.b16 %v110
    %v207 = vunpack.c.l.b16 %v111
    %v208 = vunpack.c.l.b16 %v112
    %v209 = vunpack.c.l.b16 %v113
    %v210 = vunpack.c.l.b16 %v114
    %v211 = vunpack.c.l.b16 %v115
    %v212 = vunpack.c.l.b16 %v116
    %v213 = vunpack.c.l.b16 %v117
    %v214 = vunpack.c.l.b16 %v118
    %v215 = vunpack.c.l.b16 %v119
    %v216 = vunpack.c.l.b16 %v120
    %v217 = vunpack.c.l.b16 %v121
    %v218 = vunpack.c.l.b16 %v122
    %v219 = vunpack.c.l.b16 %v123
    %v220 = vunpack.c.l.b16 %v124
    %v221 = vunpack.c.l.b16 %v125
    %v222 = vunpack.c.l.b16 %v126
    %v223 = vunpack.c.l.b16 %v127
    %v224 = vunpack.c.l.b16 %v128
    %v225 = vunpack.c.l.b16 %v129
    %v226 = vunpack.c.l.b16 %v130
    %v227 = vunpack.c.l.b16 %v131
    %v228 = vunpack.c.l.b16 %v132
    %v229 = vunpack.c.l.b16 %v133
    %v230 = vunpack.c.l.b16 %v134
    %v231 = vunpack.c.l.b16 %v135
    %v232 = vunpack.c.l.b16 %v136
    %v233 = vunpack.c.l.b16 %v137
    %v234 = vunpack.c.l.b16 %v138
    %v235 = vunpack.c.l.b16 %v139
    %v236 = vunpack.c.l.b16 %v140
    %v237 = vunpack.c.l.b16 %v141
    %v238 = vunpack.c.l.b16 %v142
    %v239 = vunpack.c.l.b16 %v143
    %v240 = vunpack.c.l.b16 %v144
    %v241 = vpack.c.b16 %v194, %v193
    %v242 = vpack.c.b16 %v196, %v195
    %v243 = vpack.c.b16 %v198, %v197
    %v244 = vpack.c.b16 %v200, %v199
    %v245 = vpack.c.b16 %v202, %v201
    %v246 = vpack.c.b16 %v204, %v203
    %v247 = vpack.c.b16 %v206, %v205
    %v248 = vpack.c.b16 %v208, %v207
    %v249 = vpack.c.b16 %v210, %v209
    %v250 = vpack.c.b16 %v212, %v211
    %v251 = vpack.c.b16 %v214, %v213
    %v252 = vpack.c.b16 %v216, %v215
    %v253 = vpack.c.b16 %v218, %v217
    %v254 = vpack.c.b16 %v220, %v219
    %v255 = vpack.c.b16 %v222, %v221
    %v256 = vpack.c.b16 %v224, %v223
    %v257 = vpack.c.b16 %v226, %v225
    %v258 = vpack.c.b16 %v228, %v227
    %v259 = vpack.c.b16 %v230, %v229
    %v260 = vpack.c.b16 %v232, %v231
    %v261 = vpack.c.b16 %v234, %v233
    %v262 = vpack.c.b16 %v236, %v235
    %v263 = vpack.c.b16 %v238, %v237
    %v264 = vpack.c.b16 %v240, %v239
    %289 = vmatprep.subr.bf16.mxu0 0
    %290 = vmatpush1.bf16.msra.mxu0 %v241
    %291 = vmatprep.subr.bf16.mxu0 0
    %292 = vmatpush1.bf16.msra.mxu0 %v242
    %293 = vmatprep.subr.bf16.mxu0 0
    %294 = vmatpush1.bf16.msra.mxu0 %v243
    %295 = vmatprep.subr.bf16.mxu0 0
    %296 = vmatpush1.bf16.msra.mxu0 %v244
    %297 = vmatprep.subr.bf16.mxu0 0
    %298 = vmatpush1.bf16.msra.mxu0 %v245
    %299 = vmatprep.subr.bf16.mxu0 0
    %300 = vmatpush1.bf16.msra.mxu0 %v246
    %301 = vmatprep.subr.bf16.mxu0 0
    %302 = vmatpush1.bf16.msra.mxu0 %v247
    %303 = vmatprep.subr.bf16.mxu0 0
    %304 = vmatpush1.bf16.msra.mxu0 %v248
    %305 = vmatprep.subr.bf16.mxu0 0
    %306 = vmatpush1.bf16.msra.mxu0 %v249
    %307 = vmatprep.subr.bf16.mxu0 0
    %308 = vmatpush1.bf16.msra.mxu0 %v250
    %309 = vmatprep.subr.bf16.mxu0 0
    %310 = vmatpush1.bf16.msra.mxu0 %v251
    %311 = vmatprep.subr.bf16.mxu0 0
    %312 = vmatpush1.bf16.msra.mxu0 %v252
    %313 = vmatprep.subr.bf16.mxu0 0
    %314 = vmatpush1.bf16.msra.mxu0 %v253
    %315 = vmatprep.subr.bf16.mxu0 0
    %316 = vmatpush1.bf16.msra.mxu0 %v254
    %317 = vmatprep.subr.bf16.mxu0 0
    %318 = vmatpush1.bf16.msra.mxu0 %v255
    %319 = vmatprep.subr.bf16.mxu0 0
    %320 = vmatpush1.bf16.msra.mxu0 %v256
    %321 = vmatprep.mubr.bf16.mxu0 %v92
    %322 = vmatmul.mubr.bf16.gmra.mrb[0].mxu0 %v91
    %v323 = vpop.f32.mrb[0].mxu0
    %v324 = vadd.f32 0.0, %v323
    %v325 = vpop.f32.mrb[0].mxu0
    %v326 = vpop.f32.mrb[0].mxu0
    %v327 = vadd.f32 0.0, %v326
    %v328 = vpop.f32.mrb[0].mxu0
    %329 = vmatprep.mubr.bf16.mxu0 %v95
    %330 = vmatmul.mubr.bf16.gmra.mrb[0].mxu0 %v94
    %v331 = vpop.f32.mrb[0].mxu0
    %v332 = vadd.f32 0.0, %v331
    %v333 = vpop.f32.mrb[0].mxu0
    %v334 = vpop.f32.mrb[0].mxu0
    %v335 = vadd.f32 0.0, %v334
    %v336 = vpop.f32.mrb[0].mxu0
    %337 = vdwg.mxu0
    %338 = vmatprep.subr.bf16.mxu0 0
    %339 = vmatpush1.bf16.msra.mxu0 %v257
    %340 = vmatprep.subr.bf16.mxu0 0
    %341 = vmatpush1.bf16.msra.mxu0 %v258
    %342 = vmatprep.subr.bf16.mxu0 0
    %343 = vmatpush1.bf16.msra.mxu0 %v259
    %344 = vmatprep.subr.bf16.mxu0 0
    %345 = vmatpush1.bf16.msra.mxu0 %v260
    %346 = vmatprep.subr.bf16.mxu0 0
    %347 = vmatpush1.bf16.msra.mxu0 %v261
    %348 = vmatprep.subr.bf16.mxu0 0
    %349 = vmatpush1.bf16.msra.mxu0 %v262
    %350 = vmatprep.subr.bf16.mxu0 0
    %351 = vmatpush1.bf16.msra.mxu0 %v263
    %352 = vmatprep.subr.bf16.mxu0 0
    %353 = vmatpush1.bf16.msra.mxu0 %v264
    %354 = vmatprep.subr.bf16.mxu0 0
    %355 = vmatpush1.bf16.msra.mxu0 0
    %356 = vmatprep.subr.bf16.mxu0 0
    %357 = vmatpush1.bf16.msra.mxu0 0
    %358 = vmatprep.subr.bf16.mxu0 0
    %359 = vmatpush1.bf16.msra.mxu0 0
    %360 = vmatprep.subr.bf16.mxu0 0
    %361 = vmatpush1.bf16.msra.mxu0 0
    %362 = vmatprep.subr.bf16.mxu0 0
    %363 = vmatpush1.bf16.msra.mxu0 0
    %364 = vmatprep.subr.bf16.mxu0 0
    %365 = vmatpush1.bf16.msra.mxu0 0
    %366 = vmatprep.subr.bf16.mxu0 0
    %367 = vmatpush1.bf16.msra.mxu0 0
    %368 = vmatprep.subr.bf16.mxu0 0
    %369 = vmatpush1.bf16.msra.mxu0 0
    %370 = vmatprep.mubr.bf16.mxu0 0
    %371 = vmatmul.mubr.bf16.gmra.mrb[0].mxu0 %v93
    %v372 = vpop.f32.mrb[0].mxu0
    %v373 = vadd.f32 %v324, %v372
    %v374 = vpop.f32.mrb[0].mxu0
    %v375 = vpop.f32.mrb[0].mxu0
    %v376 = vadd.f32 %v327, %v375
    %v377 = vpop.f32.mrb[0].mxu0
    %378 = vmatprep.mubr.bf16.mxu0 0
    %379 = vmatmul.mubr.bf16.gmra.mrb[0].mxu0 %v96
    %v380 = vpop.f32.mrb[0].mxu0
    %v381 = vadd.f32 %v332, %v380
    %v382 = vpop.f32.mrb[0].mxu0
    %v383 = vpop.f32.mrb[0].mxu0
    %v384 = vadd.f32 %v335, %v383
    %v385 = vpop.f32.mrb[0].mxu0
    %386 = vdwg.mxu0
    %v387 = vld [vmem:[%s2] sm:$0x1]
    %v389 = vlaneseq
    %v390 = vshrl.u32 %v389, 7
    %v391 = vsub.s32 0, %v390
    %v392 = vrot.slane %v387, %v391
    %v394 = vadd.f32 %v373, %v392
    %v395 = vadd.f32 %v376, %v392
    %v396 = vadd.f32 %v381, %v392
    %v397 = vadd.f32 %v384, %v392
    %v398 = vmin.f32 %v394, 20.0
    %v399 = vmin.f32 %v395, 20.0
    %v400 = vmin.f32 %v396, 20.0
    %v401 = vmin.f32 %v397, 20.0
    %v402 = vmul.f32 %v398, 1.442695
    %v403 = vpow.pop %v402
    %v404 = vmul.f32 %v399, 1.442695
    %v405 = vpow.pop %v404
    %v406 = vmul.f32 %v400, 1.442695
    %v407 = vpow.pop %v406
    %v408 = vmul.f32 %v401, 1.442695
    %v409 = vpow.pop %v408
    %v410 = vadd.f32 %v403, 1.0
    %v411 = vadd.f32 %v405, 1.0
    %v412 = vadd.f32 %v407, 1.0
    %v413 = vadd.f32 %v409, 1.0
    %v414 = vmul.f32 %v410, %v410
    %v415 = vmul.f32 %v411, %v411
    %v416 = vmul.f32 %v412, %v412
    %v417 = vmul.f32 %v413, %v413
    %v418 = vsub.f32 %v414, 1.0
    %v419 = vsub.f32 %v415, 1.0
    %v420 = vsub.f32 %v416, 1.0
    %v421 = vsub.f32 %v417, 1.0
    %v422 = vmul.f32 %v394, %v418
    %v423 = vmul.f32 %v395, %v419
    %v424 = vmul.f32 %v396, %v420
    %v425 = vmul.f32 %v397, %v421
    %v426 = vadd.f32 %v414, 1.0
    %v427 = vadd.f32 %v415, 1.0
    %v428 = vadd.f32 %v416, 1.0
    %v429 = vadd.f32 %v417, 1.0
    %v430 = vrcp.pop %v426
    %v431 = vrcp.pop %v427
    %v432 = vrcp.pop %v428
    %v433 = vrcp.pop %v429
    %v434 = vmul.f32 %v422, %v430
    %v435 = vmul.f32 %v423, %v431
    %v436 = vmul.f32 %v424, %v432
    %v437 = vmul.f32 %v425, %v433
    %438 = vst [vmem:[#allocation2 + $0x1] sm:$0xff] %v434
    %439 = vst [vmem:[#allocation2 + $0x9] sm:$0xff] %v435
    %440 = vst [vmem:[#allocation2 + $0x19] sm:$0xff] %v436
    %441 = vst [vmem:[#allocation2 + $0x21] sm:$0xff] %v437
    %v442 = vld [vmem:[#allocation2] sm:$0xff]
    %v443 = vld [vmem:[#allocation2 + $0x8] sm:$0xff]
    %v444 = vld [vmem:[#allocation2 + $0x18] sm:$0xff]
    %v445 = vld [vmem:[#allocation2 + $0x20] sm:$0xff]
    %v446 = vld [vmem:[#allocation2 + $0x1] sm:$0xff]
    %v447 = vld [vmem:[#allocation2 + $0x9] sm:$0xff]
    %v448 = vld [vmem:[#allocation2 + $0x19] sm:$0xff]
    %v449 = vld [vmem:[#allocation2 + $0x21] sm:$0xff]
    %v450 = vld [vmem:[#allocation2 + $0x2] sm:$0xff]
    %v451 = vld [vmem:[#allocation2 + $0xa] sm:$0xff]
    %v452 = vld [vmem:[#allocation2 + $0x1a] sm:$0xff]
    %v453 = vld [vmem:[#allocation2 + $0x22] sm:$0xff]
    %v454 = vpack.c.bf16 %v443, %v442
    %v455 = vpack.c.bf16 %v447, %v446
    %v456 = vpack.c.bf16 %v451, %v450
    %v457 = vpack.c.bf16 %v445, %v444
    %v458 = vpack.c.bf16 %v449, %v448
    %v459 = vpack.c.bf16 %v453, %v452
    %v460 = vld [vmem:[#allocation8] sm:$0xf]
    %v461 = vld [vmem:[#allocation8 + $0x4] sm:$0xf]
    %v462 = vld [vmem:[#allocation8 + $0x8] sm:$0xf]
    %v463 = vld [vmem:[#allocation8 + $0xc] sm:$0xf]
    %v464 = vld [vmem:[#allocation8 + $0x10] sm:$0xf]
    %v465 = vld [vmem:[#allocation8 + $0x14] sm:$0xf]
    %v466 = vld [vmem:[#allocation8 + $0x18] sm:$0xf]
    %v467 = vld [vmem:[#allocation8 + $0x1c] sm:$0xf]
    %v468 = vld [vmem:[#allocation8 + $0x20] sm:$0xf]
    %v469 = vld [vmem:[#allocation8 + $0x24] sm:$0xf]
    %v470 = vld [vmem:[#allocation8 + $0x28] sm:$0xf]
    %v471 = vld [vmem:[#allocation8 + $0x2c] sm:$0xf]
    %v472 = vld [vmem:[#allocation8 + $0x30] sm:$0xf]
    %v473 = vld [vmem:[#allocation8 + $0x34] sm:$0xf]
    %v474 = vld [vmem:[#allocation8 + $0x38] sm:$0xf]
    %v475 = vld [vmem:[#allocation8 + $0x3c] sm:$0xf]
    %v476 = vld [vmem:[#allocation8 + $0x40] sm:$0xf]
    %v477 = vld [vmem:[#allocation8 + $0x44] sm:$0xf]
    %v478 = vld [vmem:[#allocation8 + $0x48] sm:$0xf]
    %v479 = vld [vmem:[#allocation8 + $0x4c] sm:$0xf]
    %v480 = vld [vmem:[#allocation8 + $0x50] sm:$0xf]
    %v481 = vld [vmem:[#allocation8 + $0x54] sm:$0xf]
    %v482 = vld [vmem:[#allocation8 + $0x58] sm:$0xf]
    %v483 = vld [vmem:[#allocation8 + $0x5c] sm:$0xf]
    %v484 = vld [vmem:[#allocation8 + $0x60] sm:$0xf]
    %v485 = vld [vmem:[#allocation8 + $0x64] sm:$0xf]
    %v486 = vld [vmem:[#allocation8 + $0x68] sm:$0xf]
    %v487 = vld [vmem:[#allocation8 + $0x6c] sm:$0xf]
    %v488 = vld [vmem:[#allocation8 + $0x70] sm:$0xf]
    %v489 = vld [vmem:[#allocation8 + $0x74] sm:$0xf]
    %v490 = vld [vmem:[#allocation8 + $0x78] sm:$0xf]
    %v491 = vld [vmem:[#allocation8 + $0x7c] sm:$0xf]
    %v492 = vld [vmem:[#allocation8 + $0x80] sm:$0xf]
    %v493 = vld [vmem:[#allocation8 + $0x84] sm:$0xf]
    %v494 = vld [vmem:[#allocation8 + $0x88] sm:$0xf]
    %v495 = vld [vmem:[#allocation8 + $0x8c] sm:$0xf]
    %v496 = vld [vmem:[#allocation8 + $0x90] sm:$0xf]
    %v497 = vld [vmem:[#allocation8 + $0x94] sm:$0xf]
    %v498 = vld [vmem:[#allocation8 + $0x98] sm:$0xf]
    %v499 = vld [vmem:[#allocation8 + $0x9c] sm:$0xf]
    %v500 = vld [vmem:[#allocation8 + $0xa0] sm:$0xf]
    %v501 = vld [vmem:[#allocation8 + $0xa4] sm:$0xf]
    %v502 = vld [vmem:[#allocation8 + $0xa8] sm:$0xf]
    %v503 = vld [vmem:[#allocation8 + $0xac] sm:$0xf]
    %v504 = vld [vmem:[#allocation8 + $0xb0] sm:$0xf]
    %v505 = vld [vmem:[#allocation8 + $0xb4] sm:$0xf]
    %v506 = vld [vmem:[#allocation8 + $0xb8] sm:$0xf]
    %v507 = vld [vmem:[#allocation8 + $0xbc] sm:$0xf]
    %v556 = vunpack.c.l.b16 %v460
    %v557 = vunpack.c.l.b16 %v461
    %v558 = vunpack.c.l.b16 %v462
    %v559 = vunpack.c.l.b16 %v463
    %v560 = vunpack.c.l.b16 %v464
    %v561 = vunpack.c.l.b16 %v465
    %v562 = vunpack.c.l.b16 %v466
    %v563 = vunpack.c.l.b16 %v467
    %v564 = vunpack.c.l.b16 %v468
    %v565 = vunpack.c.l.b16 %v469
    %v566 = vunpack.c.l.b16 %v470
    %v567 = vunpack.c.l.b16 %v471
    %v568 = vunpack.c.l.b16 %v472
    %v569 = vunpack.c.l.b16 %v473
    %v570 = vunpack.c.l.b16 %v474
    %v571 = vunpack.c.l.b16 %v475
    %v572 = vunpack.c.l.b16 %v476
    %v573 = vunpack.c.l.b16 %v477
    %v574 = vunpack.c.l.b16 %v478
    %v575 = vunpack.c.l.b16 %v479
    %v576 = vunpack.c.l.b16 %v480
    %v577 = vunpack.c.l.b16 %v481
    %v578 = vunpack.c.l.b16 %v482
    %v579 = vunpack.c.l.b16 %v483
    %v580 = vunpack.c.l.b16 %v484
    %v581 = vunpack.c.l.b16 %v485
    %v582 = vunpack.c.l.b16 %v486
    %v583 = vunpack.c.l.b16 %v487
    %v584 = vunpack.c.l.b16 %v488
    %v585 = vunpack.c.l.b16 %v489
    %v586 = vunpack.c.l.b16 %v490
    %v587 = vunpack.c.l.b16 %v491
    %v588 = vunpack.c.l.b16 %v492
    %v589 = vunpack.c.l.b16 %v493
    %v590 = vunpack.c.l.b16 %v494
    %v591 = vunpack.c.l.b16 %v495
    %v592 = vunpack.c.l.b16 %v496
    %v593 = vunpack.c.l.b16 %v497
    %v594 = vunpack.c.l.b16 %v498
    %v595 = vunpack.c.l.b16 %v499
    %v596 = vunpack.c.l.b16 %v500
    %v597 = vunpack.c.l.b16 %v501
    %v598 = vunpack.c.l.b16 %v502
    %v599 = vunpack.c.l.b16 %v503
    %v600 = vunpack.c.l.b16 %v504
    %v601 = vunpack.c.l.b16 %v505
    %v602 = vunpack.c.l.b16 %v506
    %v603 = vunpack.c.l.b16 %v507
    %v604 = vpack.c.b16 %v557, %v556
    %v605 = vpack.c.b16 %v559, %v558
    %v606 = vpack.c.b16 %v561, %v560
    %v607 = vpack.c.b16 %v563, %v562
    %v608 = vpack.c.b16 %v565, %v564
    %v609 = vpack.c.b16 %v567, %v566
    %v610 = vpack.c.b16 %v569, %v568
    %v611 = vpack.c.b16 %v571, %v570
    %v612 = vpack.c.b16 %v573, %v572
    %v613 = vpack.c.b16 %v575, %v574
    %v614 = vpack.c.b16 %v577, %v576
    %v615 = vpack.c.b16 %v579, %v578
    %v616 = vpack.c.b16 %v581, %v580
    %v617 = vpack.c.b16 %v583, %v582
    %v618 = vpack.c.b16 %v585, %v584
    %v619 = vpack.c.b16 %v587, %v586
    %v620 = vpack.c.b16 %v589, %v588
    %v621 = vpack.c.b16 %v591, %v590
    %v622 = vpack.c.b16 %v593, %v592
    %v623 = vpack.c.b16 %v595, %v594
    %v624 = vpack.c.b16 %v597, %v596
    %v625 = vpack.c.b16 %v599, %v598
    %v626 = vpack.c.b16 %v601, %v600
    %v627 = vpack.c.b16 %v603, %v602
    %652 = vmatprep.subr.bf16.mxu0 0
    %653 = vmatpush1.bf16.msra.mxu0 %v604
    %654 = vmatprep.subr.bf16.mxu0 0
    %655 = vmatpush1.bf16.msra.mxu0 %v605
    %656 = vmatprep.subr.bf16.mxu0 0
    %657 = vmatpush1.bf16.msra.mxu0 %v606
    %658 = vmatprep.subr.bf16.mxu0 0
    %659 = vmatpush1.bf16.msra.mxu0 %v607
    %660 = vmatprep.subr.bf16.mxu0 0
    %661 = vmatpush1.bf16.msra.mxu0 %v608
    %662 = vmatprep.subr.bf16.mxu0 0
    %663 = vmatpush1.bf16.msra.mxu0 %v609
    %664 = vmatprep.subr.bf16.mxu0 0
    %665 = vmatpush1.bf16.msra.mxu0 %v610
    %666 = vmatprep.subr.bf16.mxu0 0
    %667 = vmatpush1.bf16.msra.mxu0 %v611
    %668 = vmatprep.subr.bf16.mxu0 0
    %669 = vmatpush1.bf16.msra.mxu0 %v612
    %670 = vmatprep.subr.bf16.mxu0 0
    %671 = vmatpush1.bf16.msra.mxu0 %v613
    %672 = vmatprep.subr.bf16.mxu0 0
    %673 = vmatpush1.bf16.msra.mxu0 %v614
    %674 = vmatprep.subr.bf16.mxu0 0
    %675 = vmatpush1.bf16.msra.mxu0 %v615
    %676 = vmatprep.subr.bf16.mxu0 0
    %677 = vmatpush1.bf16.msra.mxu0 %v616
    %678 = vmatprep.subr.bf16.mxu0 0
    %679 = vmatpush1.bf16.msra.mxu0 %v617
    %680 = vmatprep.subr.bf16.mxu0 0
    %681 = vmatpush1.bf16.msra.mxu0 %v618
    %682 = vmatprep.subr.bf16.mxu0 0
    %683 = vmatpush1.bf16.msra.mxu0 %v619
    %684 = vmatprep.mubr.bf16.mxu0 %v455
    %685 = vmatmul.mubr.bf16.gmra.mrb[0].mxu0 %v454
    %v686 = vpop.f32.mrb[0].mxu0
    %v687 = vadd.f32 0.0, %v686
    %v688 = vpop.f32.mrb[0].mxu0
    %v689 = vpop.f32.mrb[0].mxu0
    %v690 = vadd.f32 0.0, %v689
    %v691 = vpop.f32.mrb[0].mxu0
    %692 = vmatprep.mubr.bf16.mxu0 %v458
    %693 = vmatmul.mubr.bf16.gmra.mrb[0].mxu0 %v457
    %v694 = vpop.f32.mrb[0].mxu0
    %v695 = vadd.f32 0.0, %v694
    %v696 = vpop.f32.mrb[0].mxu0
    %v697 = vpop.f32.mrb[0].mxu0
    %v698 = vadd.f32 0.0, %v697
    %v699 = vpop.f32.mrb[0].mxu0
    %700 = vdwg.mxu0
    %701 = vmatprep.subr.bf16.mxu0 0
    %702 = vmatpush1.bf16.msra.mxu0 %v620
    %703 = vmatprep.subr.bf16.mxu0 0
    %704 = vmatpush1.bf16.msra.mxu0 %v621
    %705 = vmatprep.subr.bf16.mxu0 0
    %706 = vmatpush1.bf16.msra.mxu0 %v622
    %707 = vmatprep.subr.bf16.mxu0 0
    %708 = vmatpush1.bf16.msra.mxu0 %v623
    %709 = vmatprep.subr.bf16.mxu0 0
    %710 = vmatpush1.bf16.msra.mxu0 %v624
    %711 = vmatprep.subr.bf16.mxu0 0
    %712 = vmatpush1.bf16.msra.mxu0 %v625
    %713 = vmatprep.subr.bf16.mxu0 0
    %714 = vmatpush1.bf16.msra.mxu0 %v626
    %715 = vmatprep.subr.bf16.mxu0 0
    %716 = vmatpush1.bf16.msra.mxu0 %v627
    %717 = vmatprep.subr.bf16.mxu0 0
    %718 = vmatpush1.bf16.msra.mxu0 0
    %719 = vmatprep.subr.bf16.mxu0 0
    %720 = vmatpush1.bf16.msra.mxu0 0
    %721 = vmatprep.subr.bf16.mxu0 0
    %722 = vmatpush1.bf16.msra.mxu0 0
    %723 = vmatprep.subr.bf16.mxu0 0
    %724 = vmatpush1.bf16.msra.mxu0 0
    %725 = vmatprep.subr.bf16.mxu0 0
    %726 = vmatpush1.bf16.msra.mxu0 0
    %727 = vmatprep.subr.bf16.mxu0 0
    %728 = vmatpush1.bf16.msra.mxu0 0
    %729 = vmatprep.subr.bf16.mxu0 0
    %730 = vmatpush1.bf16.msra.mxu0 0
    %731 = vmatprep.subr.bf16.mxu0 0
    %732 = vmatpush1.bf16.msra.mxu0 0
    %733 = vmatprep.mubr.bf16.mxu0 0
    %734 = vmatmul.mubr.bf16.gmra.mrb[0].mxu0 %v456
    %v735 = vpop.f32.mrb[0].mxu0
    %v736 = vadd.f32 %v687, %v735
    %v737 = vpop.f32.mrb[0].mxu0
    %v738 = vpop.f32.mrb[0].mxu0
    %v739 = vadd.f32 %v690, %v738
    %v740 = vpop.f32.mrb[0].mxu0
    %741 = vmatprep.mubr.bf16.mxu0 0
    %742 = vmatmul.mubr.bf16.gmra.mrb[0].mxu0 %v459
    %v743 = vpop.f32.mrb[0].mxu0
    %v744 = vadd.f32 %v695, %v743
    %v745 = vpop.f32.mrb[0].mxu0
    %v746 = vpop.f32.mrb[0].mxu0
    %v747 = vadd.f32 %v698, %v746
    %v748 = vpop.f32.mrb[0].mxu0
    %749 = vdwg.mxu0
    %v750 = vld [vmem:[%s4] sm:$0x1]
    %v752 = vlaneseq
    %v753 = vshrl.u32 %v752, 7
    %v754 = vsub.s32 0, %v753
    %v755 = vrot.slane %v750, %v754
    %v757 = vadd.f32 %v736, %v755
    %v758 = vadd.f32 %v739, %v755
    %v759 = vadd.f32 %v744, %v755
    %v760 = vadd.f32 %v747, %v755
    %v761 = vadd.f32 %v757, %v71
    %v762 = vadd.f32 %v758, %v72
    %v763 = vadd.f32 %v759, %v73
    %v764 = vadd.f32 %v760, %v74
    %v765 = vpack.c.bf16 %v762, %v761
    %v766 = vpack.c.bf16 %v764, %v763
    %v769 = vunpack.c.l.b16 %v765
    %v770 = vunpack.c.h.b16 %v765
    %v771 = vunpack.c.l.b16 %v766
    %v772 = vunpack.c.h.b16 %v766
    %v773 = vpack.c.b16 %v769, %v769
    %v774 = vpack.c.b16 %v770, %v770
    %v775 = vpack.c.b16 %v771, %v771
    %v776 = vpack.c.b16 %v772, %v772
    %781 = vst [vmem:[#allocation9] sm:$0xf] %v773
    %782 = vst [vmem:[#allocation9 + $0x4] sm:$0xf] %v774
    %783 = vst [vmem:[#allocation9 + $0x8] sm:$0xf] %v775
    %784 = vst [vmem:[#allocation9 + $0xc] sm:$0xf] %v776
    // Predicated region
    $region34: #{tpu_custom_call.1} parent=1 // pred_check
      _
    $region35: #{tpu_custom_call.1} parent=1 // pred_check_branch
      %786 = sbr.rel (0) target = $region37
    $region36: #{tpu_custom_call.1} parent=1 // pred_region
      %s788 = ssub.s32 256, 256
      %789 = vsyncadd [#allocation5], %s788
      %s790 = sshll.u32 [#allocation9], 4
      %s791 = int_to_ptr.vmem [resolvable:$true] %s790
      %796 = dma.vmem_to_hbm [thread:$0]  %s791, 256, %s5, [#allocation5], 64, 64, 4
    $region37: #{tpu_custom_call.1} parent=1 // pred_fallthru
      _
    // Predicated region
    $region38: #{tpu_custom_call.1} parent=1 // pred_check
      _
    $region39: #{tpu_custom_call.1} parent=1 // pred_check_branch
      %798 = sbr.rel (0) target = $region41
    $region40: #{tpu_custom_call.1} parent=1 // pred_region
      %799 = dma.done [#allocation5], 256
    $region41: #{tpu_custom_call.1} parent=1 // pred_fallthru
      _
    %800 = vsyncpa [#allocation4], 1
    %801 = vsyncpa [#allocation7], 1
    %802 = vsyncpa [#allocation5], 1

</llo_original>
